<compile_context>
chip_gen: v7x
topology: tpu7x:2x2x1
jax: 0.10.0
libtpu: 0.0.40
codegen_flags: <defaults>
</compile_context>

<pallas_src>
import functools
import math

import jax
import jax.numpy as jnp
import numpy as np
from jax.experimental import pallas as pl
from jax.experimental.pallas import tpu as pltpu


# ----------------------------------------------------------------------------
# Kernels
# ----------------------------------------------------------------------------
def gcn_spmm_kernel(kt_ref, nnz_ref, adj_ref, z_ref, b_ref, dinv_ref,
                    out_ref, acc_ref, *, apply_relu):
    """out[i] = act( dinv_row * (sum_k A[i,k] @ Zp[k]) + b ).

    grid = (row_tile i, schedule step j).  The j axis only walks the
    (statically bounded) non-zero k-tiles of A for row-tile i; padded steps
    repeat the previous k-tile index (no new DMA) and are masked out.
    Zp already contains the column D^{-1/2} scaling and the weight matmul.
    """
    i = pl.program_id(0)
    j = pl.program_id(1)

    @pl.when(j == 0)
    def _init():
        acc_ref[...] = jnp.zeros_like(acc_ref)

    @pl.when(j < nnz_ref[i])
    def _accumulate():
        z = z_ref[...]
        # int8 binary mask -> f32 -> bf16 (portable convert chain), MXU in bf16.
        a = adj_ref[...].astype(jnp.float32).astype(z.dtype)
        acc_ref[...] += jnp.dot(a, z, preferred_element_type=jnp.float32)

    @pl.when(j == pl.num_programs(1) - 1)
    def _finalize():
        # NOTE: padded rows have dinv == 0, so they receive h = act(b); benign
        # because A's pad columns and the pool matrix zero them out downstream.
        h = acc_ref[...] * dinv_ref[...] + b_ref[...]
        if apply_relu:
            h = jnp.maximum(h, 0.0)
        out_ref[...] = h.astype(out_ref.dtype)


def gcn_spmm_pool_kernel(kt_ref, nnz_ref, adj_ref, z_ref, b_ref, dinv_ref,
                         pool_ref, out_ref, acc_ref):
    """Last GCN layer (no activation) fused with mean-pool partials.

    finalize emits P[:, row_tile] @ h_tile of shape (G, hidden); the tiny
    cross-tile sum + Linear(hidden, 1) happens in XLA.  Keeps the row axis
    'parallel' (no cross-tile accumulator) and removes the h2 HBM round trip.
    """
    i = pl.program_id(0)
    j = pl.program_id(1)

    @pl.when(j == 0)
    def _init():
        acc_ref[...] = jnp.zeros_like(acc_ref)

    @pl.when(j < nnz_ref[i])
    def _accumulate():
        z = z_ref[...]
        a = adj_ref[...].astype(jnp.float32).astype(z.dtype)
        acc_ref[...] += jnp.dot(a, z, preferred_element_type=jnp.float32)

    @pl.when(j == pl.num_programs(1) - 1)
    def _finalize():
        h = acc_ref[...] * dinv_ref[...] + b_ref[...]            # (tile_m, H) f32
        part = jnp.dot(pool_ref[...], h,
                       preferred_element_type=jnp.float32)       # (G, H)
        out_ref[...] = part[None, :, :]


# ----------------------------------------------------------------------------
# pallas_call wrappers
# ----------------------------------------------------------------------------
def _gcn_layer_call(adj_i8, zp, b, dinv_rows, kt_ids, nnz, *, tile_m, tile_k,
                    apply_relu, out_dtype):
    n_pad = adj_i8.shape[0]
    n_tiles_m = n_pad // tile_m
    max_k = kt_ids.shape[1]
    hidden = zp.shape[1]

    grid_spec = pltpu.PrefetchScalarGridSpec(
        num_scalar_prefetch=2,
        grid=(n_tiles_m, max_k),
        in_specs=[
            # Â tile: data-dependent k-tile index from the SMEM schedule.
            pl.BlockSpec((tile_m, tile_k), lambda i, j, kt, nz: (i, kt[i, j])),
            # pre-multiplied / pre-scaled node features matching the Â column.
            pl.BlockSpec((tile_k, hidden), lambda i, j, kt, nz: (kt[i, j], 0)),
            # bias and row-scaling stay resident.
            pl.BlockSpec((1, hidden), lambda i, j, kt, nz: (0, 0)),
            pl.BlockSpec((tile_m, 1), lambda i, j, kt, nz: (i, 0)),
        ],
        out_specs=pl.BlockSpec((tile_m, hidden), lambda i, j, kt, nz: (i, 0)),
        scratch_shapes=[pltpu.VMEM((tile_m, hidden), jnp.float32)],
    )
    return pl.pallas_call(
        functools.partial(gcn_spmm_kernel, apply_relu=apply_relu),
        out_shape=jax.ShapeDtypeStruct((n_pad, hidden), out_dtype),
        grid_spec=grid_spec,
        compiler_params=pltpu.CompilerParams(
            dimension_semantics=("parallel", "arbitrary"),
            vmem_limit_bytes=32 * 1024 * 1024),
    )(kt_ids, nnz, adj_i8, zp, b.reshape(1, -1), dinv_rows)


def _gcn_layer_pool_call(adj_i8, zp, b, dinv_rows, pool_mat, kt_ids, nnz, *,
                         tile_m, tile_k):
    n_pad = adj_i8.shape[0]
    n_tiles_m = n_pad // tile_m
    max_k = kt_ids.shape[1]
    hidden = zp.shape[1]
    num_graphs = pool_mat.shape[0]

    grid_spec = pltpu.PrefetchScalarGridSpec(
        num_scalar_prefetch=2,
        grid=(n_tiles_m, max_k),
        in_specs=[
            pl.BlockSpec((tile_m, tile_k), lambda i, j, kt, nz: (i, kt[i, j])),
            pl.BlockSpec((tile_k, hidden), lambda i, j, kt, nz: (kt[i, j], 0)),
            pl.BlockSpec((1, hidden), lambda i, j, kt, nz: (0, 0)),
            pl.BlockSpec((tile_m, 1), lambda i, j, kt, nz: (i, 0)),
            pl.BlockSpec((num_graphs, tile_m), lambda i, j, kt, nz: (0, i)),
        ],
        out_specs=pl.BlockSpec((1, num_graphs, hidden),
                               lambda i, j, kt, nz: (i, 0, 0)),
        scratch_shapes=[pltpu.VMEM((tile_m, hidden), jnp.float32)],
    )
    return pl.pallas_call(
        gcn_spmm_pool_kernel,
        out_shape=jax.ShapeDtypeStruct((n_tiles_m, num_graphs, hidden),
                                       jnp.float32),
        grid_spec=grid_spec,
        compiler_params=pltpu.CompilerParams(
            dimension_semantics=("parallel", "arbitrary"),
            vmem_limit_bytes=32 * 1024 * 1024),
    )(kt_ids, nnz, adj_i8, zp, b.reshape(1, -1), dinv_rows, pool_mat)


# ----------------------------------------------------------------------------
# Forward pass (glue + kernels)
# ----------------------------------------------------------------------------
def gnn_wrapper_forward(x, edge_index, batch, num_graphs, params, *,
                        tile_m=256, tile_k=256, max_k_tiles=None):
    """x: (N, F) f32, edge_index: (2, E) int32 (src, dst), batch: (N,) int32.

    tile_m / tile_k must be multiples of 128.  For v7x pick tile_m so the row
    tile count is even (both TensorCores busy).  max_k_tiles is a STATIC upper
    bound on non-zero Â column-tiles per row-tile (derived from the batching
    structure, e.g. via compute_max_k_tiles); None -> fully general bound.
    """
    assert tile_m % 128 == 0 and tile_k % 128 == 0
    n = x.shape[0]
    w0, b0, w1, b1, wc, bc = params

    blk = math.lcm(tile_m, tile_k)
    n_pad = -(-n // blk) * blk
    n_tiles_m = n_pad // tile_m
    n_tiles_k = n_pad // tile_k

    # ---- binary adjacency (A + I) built directly at padded size in int8 ----
    # NOTE: duplicate edges are clamped to 1 (PyG would sum duplicate messages)
    # — only matters for multigraph inputs.
    src, dst = edge_index[0], edge_index[1]
    diag = jnp.arange(n)
    adj_i8 = (jnp.zeros((n_pad, n_pad), jnp.int8)
              .at[dst, src].set(1)
              .at[diag, diag].set(1))                      # remaining self-loops
    deg = jnp.sum(adj_i8, axis=1, dtype=jnp.int32).astype(jnp.float32)
    dinv = jnp.where(deg > 0, jax.lax.rsqrt(deg), 0.0)     # (n_pad,), pad -> 0
    dinv_rows = dinv.reshape(n_pad, 1)

    # ---- graph membership / mean-pool matrix (O(N), no dense-Â passes) ----
    batch_p = jnp.full((n_pad,), num_graphs, jnp.int32).at[:n].set(
        batch.astype(jnp.int32))
    onehot = batch_p[None, :] == jnp.arange(num_graphs, dtype=jnp.int32)[:, None]
    counts = jnp.sum(onehot, axis=1, keepdims=True).astype(jnp.float32)
    pool_mat = onehot.astype(jnp.float32) / jnp.maximum(counts, 1.0)  # (G, n_pad)

    # ---- block-diagonal schedule from batch membership (upper bound on nz) --
    mem_m = onehot.reshape(num_graphs, n_tiles_m, tile_m).any(axis=-1)
    mem_k = onehot.reshape(num_graphs, n_tiles_k, tile_k).any(axis=-1)
    tile_nz = jnp.einsum("gi,gk->ik", mem_m.astype(jnp.int32),
                         mem_k.astype(jnp.int32)) > 0        # (nTm, nTk)

    if max_k_tiles is None:
        max_k_tiles = n_tiles_k
    max_k = max(1, min(int(max_k_tiles), n_tiles_k))

    k_ids = jnp.arange(n_tiles_k, dtype=jnp.int32)
    sort_keys = jnp.where(tile_nz, k_ids[None, :], n_tiles_k + k_ids[None, :])
    order = jnp.argsort(sort_keys, axis=1).astype(jnp.int32)[:, :max_k]
    # max_k_tiles is a caller contract; clamp keeps indexing safe regardless.
    nnz = jnp.minimum(tile_nz.sum(axis=1), max_k).astype(jnp.int32)
    last_valid = order[jnp.arange(n_tiles_m), jnp.clip(nnz - 1, 0, max_k - 1)]
    kt_ids = jnp.where(jnp.arange(max_k, dtype=jnp.int32)[None, :] < nnz[:, None],
                       order, last_valid[:, None]).astype(jnp.int32)

    # ---- hoist the tiny weight matmuls + column D^{-1/2} scaling into XLA ---
    x_pad = jnp.pad(x.astype(jnp.float32), ((0, n_pad - n), (0, 0)))
    zp1 = ((x_pad * dinv_rows) @ w0).astype(jnp.bfloat16)   # (n_pad, hidden)

    # ---- GCN layer 1: relu( dinv_r * (A @ Zp1) + b0 ) ----
    h1 = _gcn_layer_call(adj_i8, zp1, b0, dinv_rows, kt_ids, nnz,
                         tile_m=tile_m, tile_k=tile_k, apply_relu=True,
                         out_dtype=jnp.bfloat16)

    zp2 = ((h1.astype(jnp.float32) * dinv_rows) @ w1).astype(jnp.bfloat16)

    # ---- GCN layer 2 (no activation) fused with mean-pool partials ----
    partials = _gcn_layer_pool_call(adj_i8, zp2, b1, dinv_rows, pool_mat,
                                    kt_ids, nnz, tile_m=tile_m, tile_k=tile_k)
    pooled = partials.sum(axis=0)                            # (G, hidden)

    # ---- classifier Linear(hidden, 1): G x hidden, trivially small -> XLA ---
    return pooled @ wc + bc


# ----------------------------------------------------------------------------
# Static schedule bound, params, pure-JAX reference, demo
# ----------------------------------------------------------------------------
def compute_max_k_tiles(batch_np, num_graphs, *, tile_m, tile_k):
    """Static (host-side) bound on non-zero Â column-tiles per row-tile."""
    n = int(batch_np.shape[0])
    blk = math.lcm(tile_m, tile_k)
    n_pad = -(-n // blk) * blk
    n_tiles_m, n_tiles_k = n_pad // tile_m, n_pad // tile_k
    nodes = np.arange(n)
    mem_m = np.zeros((num_graphs, n_tiles_m), bool)
    mem_m[batch_np, nodes // tile_m] = True
    mem_k = np.zeros((num_graphs, n_tiles_k), bool)
    mem_k[batch_np, nodes // tile_k] = True
    tile_nz = (mem_m.astype(np.int64).T @ mem_k.astype(np.int64)) > 0
    return max(1, int(tile_nz.sum(axis=1).max()))


def init_params(key, in_channels, hidden_channels):
    k0, k1, k2 = jax.random.split(key, 3)
    w0 = jax.random.normal(k0, (in_channels, hidden_channels), jnp.float32) * (
        1.0 / jnp.sqrt(in_channels))
    b0 = jnp.zeros((hidden_channels,), jnp.float32)
    w1 = jax.random.normal(k1, (hidden_channels, hidden_channels), jnp.float32) * (
        1.0 / jnp.sqrt(hidden_channels))
    b1 = jnp.zeros((hidden_channels,), jnp.float32)
    wc = jax.random.normal(k2, (hidden_channels, 1), jnp.float32) * (
        1.0 / jnp.sqrt(hidden_channels))
    bc = jnp.zeros((1,), jnp.float32)
    return (w0, b0, w1, b1, wc, bc)


def reference_forward(x, edge_index, batch, num_graphs, params):
    """Pure-JAX f32 reference of the original module semantics."""
    w0, b0, w1, b1, wc, bc = params
    n = x.shape[0]
    src, dst = edge_index[0], edge_index[1]
    diag = jnp.arange(n)
    adj = (jnp.zeros((n, n), jnp.float32)
           .at[dst, src].set(1.0)
           .at[diag, diag].set(1.0))
    deg = adj.sum(axis=1)
    dinv = jnp.where(deg > 0, 1.0 / jnp.sqrt(deg), 0.0)
    adj_n = adj * dinv[:, None] * dinv[None, :]
    h = jnp.maximum(adj_n @ (x @ w0) + b0, 0.0)
    h = adj_n @ (h @ w1) + b1
    onehot = (batch[None, :] == jnp.arange(num_graphs)[:, None]).astype(jnp.float32)
    pooled = (onehot @ h) / jnp.maximum(onehot.sum(axis=1, keepdims=True), 1.0)
    return pooled @ wc + bc


def _ring_batch(num_graphs, nodes_per_graph):
    edges = []
    for g in range(num_graphs):
        base = g * nodes_per_graph
        for i in range(nodes_per_graph):
            a, b = base + i, base + (i + 1) % nodes_per_graph
            edges.append((a, b))
            edges.append((b, a))
    edge_index = np.array(edges, dtype=np.int32).T
    batch = np.array([g for g in range(num_graphs)
                      for _ in range(nodes_per_graph)], dtype=np.int32)
    return edge_index, batch


if __name__ == "__main__":
    IN_CHANNELS = 4
    HIDDEN = 32

    key = jax.random.PRNGKey(0)
    kx1, kx2, kp = jax.random.split(key, 3)
    params = init_params(kp, IN_CHANNELS, HIDDEN)

    # Case 1: 2 graphs x 8 nodes (in=4, hidden=32) -> single 128x128 tile.
    ei1_np, b1_np = _ring_batch(2, 8)
    edge_index1, batch1 = jnp.asarray(ei1_np), jnp.asarray(b1_np)
    x1 = jax.random.normal(kx1, (16, IN_CHANNELS), jnp.float32)
    mk1 = compute_max_k_tiles(b1_np, 2, tile_m=128, tile_k=128)
    out1 = jax.block_until_ready(
        gnn_wrapper_forward(x1, edge_index1, batch1, 2, params,
                            tile_m=128, tile_k=128, max_k_tiles=mk1))
    assert out1.shape == (2, 1)
    ref1 = reference_forward(x1, edge_index1, batch1, 2, params)
    np.testing.assert_allclose(np.asarray(out1), np.asarray(ref1),
                               rtol=2e-2, atol=2e-2)

    # Case 2: 4 graphs x 72 nodes -> 2 row tiles x 4 col tiles, max_k_tiles=3;
    # exercises the static schedule cap, masked padded steps, and fused pool.
    ei2_np, b2_np = _ring_batch(4, 72)
    edge_index2, batch2 = jnp.asarray(ei2_np), jnp.asarray(b2_np)
    x2 = jax.random.normal(kx2, (288, IN_CHANNELS), jnp.float32)
    mk2 = compute_max_k_tiles(b2_np, 4, tile_m=256, tile_k=128)
    out2 = jax.block_until_ready(
        gnn_wrapper_forward(x2, edge_index2, batch2, 4, params,
                            tile_m=256, tile_k=128, max_k_tiles=mk2))
    assert out2.shape == (4, 1)
    ref2 = reference_forward(x2, edge_index2, batch2, 4, params)
    np.testing.assert_allclose(np.asarray(out2), np.asarray(ref2),
                               rtol=2e-2, atol=2e-2)

    print("KERNEL_OK")
</pallas_src>

<mosaic_0001>
module attributes {stable_mosaic.version = 11 : i64} {
  func.func @gcn_spmm_kernel(%arg0: i32, %arg1: i32, %arg2: memref<1x1xi32, #tpu.memory_space<smem>>, %arg3: memref<1xi32, #tpu.memory_space<smem>>, %arg4: memref<128x128xi8, #tpu.memory_space<vmem>>, %arg5: memref<128x32xbf16, #tpu.memory_space<vmem>>, %arg6: memref<1x32xf32, #tpu.memory_space<vmem>>, %arg7: memref<128x1xf32, #tpu.memory_space<vmem>>, %arg8: memref<128x32xbf16, #tpu.memory_space<vmem>>, %arg9: memref<128x32xf32, #tpu.memory_space<vmem>>) attributes {dimension_semantics = [#tpu.dimension_semantics<parallel>, #tpu.dimension_semantics<arbitrary>], iteration_bounds = array<i64: 1, 1>, scalar_prefetch = 2 : i64, scratch_operands = 1 : i64, tpu.core_type = #tpu.core_type<tc>, window_params = [{transform_indices = @transform_0, window_bounds = array<i64: 128, 128>}, {transform_indices = @transform_1, window_bounds = array<i64: 128, 32>}, {pipeline_mode = #tpu.pipeline_mode<synchronous>, transform_indices = @transform_2, window_bounds = array<i64: 1, 32>}, {transform_indices = @transform_3, window_bounds = array<i64: 128, 1>}, {transform_indices = @transform_4, window_bounds = array<i64: 128, 32>}]} {
    %c0_i32 = arith.constant 0 : i32
    %0 = arith.cmpi eq, %arg1, %c0_i32 : i32
    %1 = arith.extui %0 : i1 to i32
    %c0_i32_0 = arith.constant 0 : i32
    %2 = arith.cmpi ne, %1, %c0_i32_0 : i32
    scf.if %2 {
      %cst = arith.constant 0.000000e+00 : f32
      %11 = vector.broadcast %cst : f32 to vector<128x32xf32>
      %c0 = arith.constant 0 : index
      %c0_4 = arith.constant 0 : index
      %12 = vector.load %arg9[%c0, %c0_4] : memref<128x32xf32, #tpu.memory_space<vmem>>, vector<128x32xf32>
      tpu.vector_store %arg9[%c0, %c0_4], %11 {strides = array<i32>} : memref<128x32xf32, #tpu.memory_space<vmem>>, vector<128x32xf32>,
    } else {
    }
    %3 = arith.index_cast %arg0 : i32 to index
    %4 = memref.load %arg3[%3] : memref<1xi32, #tpu.memory_space<smem>>
    %5 = arith.cmpi slt, %arg1, %4 : i32
    %6 = arith.extui %5 : i1 to i32
    %c0_i32_1 = arith.constant 0 : i32
    %7 = arith.cmpi ne, %6, %c0_i32_1 : i32
    scf.if %7 {
      %c0 = arith.constant 0 : index
      %c0_4 = arith.constant 0 : index
      %11 = vector.load %arg5[%c0, %c0_4] : memref<128x32xbf16, #tpu.memory_space<vmem>>, vector<128x32xbf16>
      %c0_5 = arith.constant 0 : index
      %c0_6 = arith.constant 0 : index
      %12 = vector.load %arg4[%c0_5, %c0_6] : memref<128x128xi8, #tpu.memory_space<vmem>>, vector<128x128xi8>
      %13 = arith.sitofp %12 : vector<128x128xi8> to vector<128x128xf32>
      %14 = arith.truncf %13 : vector<128x128xf32> to vector<128x128xbf16>
      %c0_7 = arith.constant 0 : index
      %c0_8 = arith.constant 0 : index
      %15 = vector.load %arg9[%c0_7, %c0_8] : memref<128x32xf32, #tpu.memory_space<vmem>>, vector<128x32xf32>
      %cst = arith.constant dense<0.000000e+00> : vector<128x32xf32>
      %16 = tpu.matmul %14, %11, %cst {dimension_numbers = #tpu.dot_dimension_numbers<[1], [0], [0], [1], [0, 0, 1, 1], [], []>} : vector<128x128xbf16>, vector<128x32xbf16>, vector<128x32xf32> -> vector<128x32xf32>
      %17 = arith.addf %15, %16 : vector<128x32xf32>
      %c0_9 = arith.constant 0 : index
      %c0_10 = arith.constant 0 : index
      %18 = vector.load %arg9[%c0_9, %c0_10] : memref<128x32xf32, #tpu.memory_space<vmem>>, vector<128x32xf32>
      tpu.vector_store %arg9[%c0_9, %c0_10], %17 {strides = array<i32>} : memref<128x32xf32, #tpu.memory_space<vmem>>, vector<128x32xf32>,
    } else {
    }
    %c0_i32_2 = arith.constant 0 : i32
    %8 = arith.cmpi eq, %arg1, %c0_i32_2 : i32
    %9 = arith.extui %8 : i1 to i32
    %c0_i32_3 = arith.constant 0 : i32
    %10 = arith.cmpi ne, %9, %c0_i32_3 : i32
    scf.if %10 {
      %c0 = arith.constant 0 : index
      %c0_4 = arith.constant 0 : index
      %11 = vector.load %arg9[%c0, %c0_4] : memref<128x32xf32, #tpu.memory_space<vmem>>, vector<128x32xf32>
      %c0_5 = arith.constant 0 : index
      %c0_6 = arith.constant 0 : index
      %12 = vector.load %arg7[%c0_5, %c0_6] : memref<128x1xf32, #tpu.memory_space<vmem>>, vector<128x1xf32>
      %13 = vector.broadcast %12 : vector<128x1xf32> to vector<128x32xf32>
      %14 = arith.mulf %11, %13 : vector<128x32xf32>
      %c0_7 = arith.constant 0 : index
      %c0_8 = arith.constant 0 : index
      %15 = vector.load %arg6[%c0_7, %c0_8] : memref<1x32xf32, #tpu.memory_space<vmem>>, vector<1x32xf32>
      %16 = vector.broadcast %15 : vector<1x32xf32> to vector<128x32xf32>
      %17 = arith.addf %14, %16 : vector<128x32xf32>
      %cst = arith.constant 0.000000e+00 : f32
      %18 = vector.broadcast %cst : f32 to vector<128x32xf32>
      %19 = arith.maximumf %17, %18 : vector<128x32xf32>
      %20 = arith.truncf %19 : vector<128x32xf32> to vector<128x32xbf16>
      %c0_9 = arith.constant 0 : index
      %c0_10 = arith.constant 0 : index
      %21 = vector.load %arg8[%c0_9, %c0_10] : memref<128x32xbf16, #tpu.memory_space<vmem>>, vector<128x32xbf16>
      tpu.vector_store %arg8[%c0_9, %c0_10], %20 {strides = array<i32>} : memref<128x32xbf16, #tpu.memory_space<vmem>>, vector<128x32xbf16>,
    } else {
    }
    return
  }
  func.func @transform_0(%arg0: i32, %arg1: i32, %arg2: memref<1x1xi32, #tpu.memory_space<smem>>, %arg3: memref<1xi32, #tpu.memory_space<smem>>) -> (i32, i32) {
    %0 = arith.index_cast %arg0 : i32 to index
    %1 = arith.index_cast %arg1 : i32 to index
    %2 = memref.load %arg2[%0, %1] : memref<1x1xi32, #tpu.memory_space<smem>>
    %c0_i32 = arith.constant 0 : i32
    return %arg0, %2 : i32, i32
  }
  func.func @transform_1(%arg0: i32, %arg1: i32, %arg2: memref<1x1xi32, #tpu.memory_space<smem>>, %arg3: memref<1xi32, #tpu.memory_space<smem>>) -> (i32, i32) {
    %0 = arith.index_cast %arg0 : i32 to index
    %1 = arith.index_cast %arg1 : i32 to index
    %2 = memref.load %arg2[%0, %1] : memref<1x1xi32, #tpu.memory_space<smem>>
    %c0_i32 = arith.constant 0 : i32
    %c0_i32_0 = arith.constant 0 : i32
    return %2, %c0_i32 : i32, i32
  }
  func.func @transform_2(%arg0: i32, %arg1: i32, %arg2: memref<1x1xi32, #tpu.memory_space<smem>>, %arg3: memref<1xi32, #tpu.memory_space<smem>>) -> (i32, i32) {
    %c0_i32 = arith.constant 0 : i32
    %c0_i32_0 = arith.constant 0 : i32
    %c0_i32_1 = arith.constant 0 : i32
    return %c0_i32, %c0_i32_0 : i32, i32
  }
  func.func @transform_3(%arg0: i32, %arg1: i32, %arg2: memref<1x1xi32, #tpu.memory_space<smem>>, %arg3: memref<1xi32, #tpu.memory_space<smem>>) -> (i32, i32) {
    %c0_i32 = arith.constant 0 : i32
    %c0_i32_0 = arith.constant 0 : i32
    return %arg0, %c0_i32 : i32, i32
  }
  func.func @transform_4(%arg0: i32, %arg1: i32, %arg2: memref<1x1xi32, #tpu.memory_space<smem>>, %arg3: memref<1xi32, #tpu.memory_space<smem>>) -> (i32, i32) {
    %c0_i32 = arith.constant 0 : i32
    %c0_i32_0 = arith.constant 0 : i32
    return %arg0, %c0_i32 : i32, i32
  }
}

</mosaic_0001>

<llo_original>
// kernel: tpu_custom_call.1
$region0: #{tpu_custom_call.1}
  #allocation0 [shape = 'u32[]', space=smem, size = 0x4, offset = 0x4, fixed_abs, tag = 'smem constant byte address 0x4 - core index']
  #allocation1 [shape = 'u32[144,128]{1,0:T(1,128)}', space=vmem, size = 0x12000, scoped, tag = 'internal scratch']
  #allocation2 [shape = 'f32[128,32]{1,0:T(8,128)}', space=vmem, size = 0x10000, scoped, tag = 'scratch operand']
  #allocation3 [shape = 's32[1]{0}', space=sflag, size = 0x4, scoped, tag = 'scoped memory for tpu_custom_call.1']
  #allocation4 [shape = 's32[1,1]{1,0:T(1,128)S(6)}', space=smem, size = 0x200, scoped, tag = 'prefetched SMEM operand 0']
  #allocation5 [shape = 's32[1]{0:T(128)S(6)}', space=smem, size = 0x200, scoped, tag = 'prefetched SMEM operand 1']
  %s0 = inlined_call_operand.<no memory space> [shape: s32[1,1], index: 0, kind: input, shape index: {}]
  %s1 = inlined_call_operand.<no memory space> [shape: s32[1], index: 1, kind: input, shape index: {}]
  %s2 = inlined_call_operand.vmem [shape: s8[128,128], index: 2, kind: input, shape index: {}]
  %s3 = inlined_call_operand.vmem [shape: bf16[128,32], index: 3, kind: input, shape index: {}]
  %s4 = inlined_call_operand.vmem [shape: f32[1,32], index: 4, kind: input, shape index: {}]
  %s5 = inlined_call_operand.vmem [shape: f32[128,1], index: 5, kind: input, shape index: {}]
  %s6 = inlined_call_operand.vmem [shape: bf16[128,32], index: 6, kind: output, shape index: {}]
  %s7 = sld [smem:[#allocation0]]
  $region38: #{tpu_custom_call.1} parent=0
    _
  %s9 = ssub.s32 1, %s7
  %s10 = scalar_select 0, %s9, %s7
  %11 = sst [smem:[#allocation4]] %s0
  %12 = sst [smem:[#allocation5]] %s1
  // Predicated region
  $region2: #{tpu_custom_call.1} parent=0 // pred_check
    _
  $region3: #{tpu_custom_call.1} parent=0 // pred_check_branch
    %14 = sbr.rel (0) target = $region5
  $region4: #{tpu_custom_call.1} parent=0 // pred_region
    %s15 = sadd.s32 0, 0
    %s16 = smul.u32 %s15, 128
    %s17 = sadd.s32 %s16, 0
    %s18 = sld [smem:[#allocation4 + %s17]]
    %p19 = scmp.lt.s32.totalorder %s18, 0
    %s20 = scalar_select %p19, %s18, 0
    %s21 = smul.addr %s20, 8
    %s22 = scalar_lea.vmem %s2, %s21
    %s23 = sadd.s32 0, 0
    %s24 = smul.u32 %s23, 128
    %s25 = sadd.s32 %s24, 0
    %s26 = sld [smem:[#allocation4 + %s25]]
  $region5: #{tpu_custom_call.1} parent=0 // pred_fallthru
    _
  // Predicated region
  $region6: #{tpu_custom_call.1} parent=0 // pred_check
    _
  $region7: #{tpu_custom_call.1} parent=0 // pred_check_branch
    %28 = sbr.rel (0) target = $region9
  $region8: #{tpu_custom_call.1} parent=0 // pred_region
    %s29 = sadd.s32 0, 0
    %s30 = smul.u32 %s29, 128
    %s31 = sadd.s32 %s30, 0
    %s32 = sld [smem:[#allocation4 + %s31]]
    %s33 = smul.u32 16, %s32
    %p34 = scmp.lt.s32.totalorder %s33, 15
    %s35 = scalar_select %p34, %s33, 15
    %s36 = smul.addr %s35, 4
    %s37 = scalar_lea.vmem %s3, %s36
    %s38 = sadd.s32 0, 0
    %s39 = smul.u32 %s38, 128
    %s40 = sadd.s32 %s39, 0
    %s41 = sld [smem:[#allocation4 + %s40]]
    %s42 = smul.u32 16, %s41
  $region9: #{tpu_custom_call.1} parent=0 // pred_fallthru
    _
  // Predicated region
  $region10: #{tpu_custom_call.1} parent=0 // pred_check
    _
  $region11: #{tpu_custom_call.1} parent=0 // pred_check_branch
    %44 = sbr.rel (0) target = $region13
  $region12: #{tpu_custom_call.1} parent=0 // pred_region
    _
  $region13: #{tpu_custom_call.1} parent=0 // pred_fallthru
    _
  // Predicated region
  $region14: #{tpu_custom_call.1} parent=0 // pred_check
    _
  $region15: #{tpu_custom_call.1} parent=0 // pred_check_branch
    %46 = sbr.rel (0) target = $region17
  $region16: #{tpu_custom_call.1} parent=0 // pred_region
    _
  $region17: #{tpu_custom_call.1} parent=0 // pred_fallthru
    _
  %s47 = sadd.s32 0, 0
  %s48 = smul.u32 %s47, 128
  %s49 = sadd.s32 %s48, 0
  %s50 = sld [smem:[#allocation4 + %s49]]
  %p51 = scmp.lt.s32.totalorder %s50, 0
  %s52 = scalar_select %p51, %s50, 0
  %s53 = smul.addr %s52, 8
  %s54 = scalar_lea.vmem %s2, %s53
  %s55 = sadd.s32 0, 0
  %s56 = smul.u32 %s55, 128
  %s57 = sadd.s32 %s56, 0
  %s58 = sld [smem:[#allocation4 + %s57]]
  %s59 = smul.u32 16, %s58
  %p60 = scmp.lt.s32.totalorder %s59, 15
  %s61 = scalar_select %p60, %s59, 15
  %s62 = smul.addr %s61, 4
  %s63 = scalar_lea.vmem %s3, %s62
  %s64 = sadd.s32 0, 0
  %s65 = smul.u32 %s64, 128
  %s66 = sadd.s32 %s65, 0
  %s67 = sld [smem:[#allocation4 + %s66]]
  %p68 = scmp.lt.s32.totalorder %s67, 0
  %s69 = scalar_select %p68, %s67, 0
  %s70 = smul.addr %s69, 8
  %s71 = scalar_lea.vmem %s2, %s70
  %s72 = sadd.s32 0, 0
  %s73 = smul.u32 %s72, 128
  %s74 = sadd.s32 %s73, 0
  %s75 = sld [smem:[#allocation4 + %s74]]
  %s76 = sadd.s32 0, 0
  %s77 = smul.u32 %s76, 128
  %s78 = sadd.s32 %s77, 0
  %s79 = sld [smem:[#allocation4 + %s78]]
  %s80 = smul.u32 16, %s79
  %p81 = scmp.lt.s32.totalorder %s80, 15
  %s82 = scalar_select %p81, %s80, 15
  %s83 = smul.addr %s82, 4
  %s84 = scalar_lea.vmem %s3, %s83
  %s85 = sadd.s32 0, 0
  %s86 = smul.u32 %s85, 128
  %s87 = sadd.s32 %s86, 0
  %s88 = sld [smem:[#allocation4 + %s87]]
  %s89 = smul.u32 16, %s88
  %p91 = scmp.eq.s32.totalorder 0, 0
  // Predicated region
  $region18: #{tpu_custom_call.1} parent=0 // pred_check
    %p92 = pneg %p91
  $region19: #{tpu_custom_call.1} parent=0 // pred_check_branch
    %94 = sbr.rel (%p92) target = $region21
  $region20: #{tpu_custom_call.1} parent=0 // pred_region
    %vm95 = vcmask 261120
    %96 = vst.msk [vmem:[#allocation2] sm:$0xff] %vm95, 0.0
    %97 = vst.msk [vmem:[#allocation2 + $0x8] sm:$0xff] %vm95, 0.0
    %98 = vst.msk [vmem:[#allocation2 + $0x10] sm:$0xff] %vm95, 0.0
    %99 = vst.msk [vmem:[#allocation2 + $0x18] sm:$0xff] %vm95, 0.0
    %100 = vst.msk [vmem:[#allocation2 + $0x20] sm:$0xff] %vm95, 0.0
    %101 = vst.msk [vmem:[#allocation2 + $0x28] sm:$0xff] %vm95, 0.0
    %102 = vst.msk [vmem:[#allocation2 + $0x30] sm:$0xff] %vm95, 0.0
    %103 = vst.msk [vmem:[#allocation2 + $0x38] sm:$0xff] %vm95, 0.0
    %104 = vst.msk [vmem:[#allocation2 + $0x40] sm:$0xff] %vm95, 0.0
    %105 = vst.msk [vmem:[#allocation2 + $0x48] sm:$0xff] %vm95, 0.0
    %106 = vst.msk [vmem:[#allocation2 + $0x50] sm:$0xff] %vm95, 0.0
    %107 = vst.msk [vmem:[#allocation2 + $0x58] sm:$0xff] %vm95, 0.0
    %108 = vst.msk [vmem:[#allocation2 + $0x60] sm:$0xff] %vm95, 0.0
    %109 = vst.msk [vmem:[#allocation2 + $0x68] sm:$0xff] %vm95, 0.0
    %110 = vst.msk [vmem:[#allocation2 + $0x70] sm:$0xff] %vm95, 0.0
    %111 = vst.msk [vmem:[#allocation2 + $0x78] sm:$0xff] %vm95, 0.0
  $region21: #{tpu_custom_call.1} parent=0 // pred_fallthru
    _
  %s112 = sld [smem:[#allocation5]]
  %p113 = scmp.lt.s32.totalorder 0, %s112
  // Predicated region
  $region22: #{tpu_custom_call.1} parent=0 // pred_check
    %p114 = pneg %p113
  $region23: #{tpu_custom_call.1} parent=0 // pred_check_branch
    %116 = sbr.rel (%p114) target = $region25
  $region24: #{tpu_custom_call.1} parent=0 // pred_region
    %v117 = vld [vmem:[%s84] sm:$0xf]
    %v118 = vld [vmem:[%s84 + $0x4] sm:$0xf]
    %v119 = vld [vmem:[%s84 + $0x8] sm:$0xf]
    %v120 = vld [vmem:[%s84 + $0xc] sm:$0xf]
    %v121 = vld [vmem:[%s84 + $0x10] sm:$0xf]
    %v122 = vld [vmem:[%s84 + $0x14] sm:$0xf]
    %v123 = vld [vmem:[%s84 + $0x18] sm:$0xf]
    %v124 = vld [vmem:[%s84 + $0x1c] sm:$0xf]
    %v125 = vld [vmem:[%s84 + $0x20] sm:$0xf]
    %v126 = vld [vmem:[%s84 + $0x24] sm:$0xf]
    %v127 = vld [vmem:[%s84 + $0x28] sm:$0xf]
    %v128 = vld [vmem:[%s84 + $0x2c] sm:$0xf]
    %v129 = vld [vmem:[%s84 + $0x30] sm:$0xf]
    %v130 = vld [vmem:[%s84 + $0x34] sm:$0xf]
    %v131 = vld [vmem:[%s84 + $0x38] sm:$0xf]
    %v132 = vld [vmem:[%s84 + $0x3c] sm:$0xf]
    %v133 = vld [vmem:[%s71] sm:$0xff]
    %v134 = vld [vmem:[%s71 + $0x8] sm:$0xff]
    %v135 = vld [vmem:[%s71 + $0x10] sm:$0xff]
    %v136 = vld [vmem:[%s71 + $0x18] sm:$0xff]
    %v137 = vunpack.c.l.s8.bf16 %v133
    %v138 = vunpack.c.h.s8.bf16 %v133
    %v139 = vunpack.c.l.s8.bf16 %v134
    %v140 = vunpack.c.h.s8.bf16 %v134
    %v141 = vunpack.c.l.s8.bf16 %v135
    %v142 = vunpack.c.h.s8.bf16 %v135
    %v143 = vunpack.c.l.s8.bf16 %v136
    %v144 = vunpack.c.h.s8.bf16 %v136
    %v145 = vld [vmem:[#allocation2] sm:$0xff]
    %v146 = vld [vmem:[#allocation2 + $0x8] sm:$0xff]
    %v147 = vld [vmem:[#allocation2 + $0x10] sm:$0xff]
    %v148 = vld [vmem:[#allocation2 + $0x18] sm:$0xff]
    %v149 = vld [vmem:[#allocation2 + $0x20] sm:$0xff]
    %v150 = vld [vmem:[#allocation2 + $0x28] sm:$0xff]
    %v151 = vld [vmem:[#allocation2 + $0x30] sm:$0xff]
    %v152 = vld [vmem:[#allocation2 + $0x38] sm:$0xff]
    %v153 = vld [vmem:[#allocation2 + $0x40] sm:$0xff]
    %v154 = vld [vmem:[#allocation2 + $0x48] sm:$0xff]
    %v155 = vld [vmem:[#allocation2 + $0x50] sm:$0xff]
    %v156 = vld [vmem:[#allocation2 + $0x58] sm:$0xff]
    %v157 = vld [vmem:[#allocation2 + $0x60] sm:$0xff]
    %v158 = vld [vmem:[#allocation2 + $0x68] sm:$0xff]
    %v159 = vld [vmem:[#allocation2 + $0x70] sm:$0xff]
    %v160 = vld [vmem:[#allocation2 + $0x78] sm:$0xff]
    %v177 = vunpack.c.l.b16 %v117
    %v178 = vunpack.c.l.b16 %v118
    %v179 = vunpack.c.l.b16 %v119
    %v180 = vunpack.c.l.b16 %v120
    %v181 = vunpack.c.l.b16 %v121
    %v182 = vunpack.c.l.b16 %v122
    %v183 = vunpack.c.l.b16 %v123
    %v184 = vunpack.c.l.b16 %v124
    %v185 = vunpack.c.l.b16 %v125
    %v186 = vunpack.c.l.b16 %v126
    %v187 = vunpack.c.l.b16 %v127
    %v188 = vunpack.c.l.b16 %v128
    %v189 = vunpack.c.l.b16 %v129
    %v190 = vunpack.c.l.b16 %v130
    %v191 = vunpack.c.l.b16 %v131
    %v192 = vunpack.c.l.b16 %v132
    %v193 = vpack.c.b16 %v178, %v177
    %v194 = vpack.c.b16 %v180, %v179
    %v195 = vpack.c.b16 %v182, %v181
    %v196 = vpack.c.b16 %v184, %v183
    %v197 = vpack.c.b16 %v186, %v185
    %v198 = vpack.c.b16 %v188, %v187
    %v199 = vpack.c.b16 %v190, %v189
    %v200 = vpack.c.b16 %v192, %v191
    %209 = vmatprep.subr.bf16.mxu0 0
    %210 = vmatpush1.bf16.msra.mxu0 %v193
    %211 = vmatprep.subr.bf16.mxu0 0
    %212 = vmatpush1.bf16.msra.mxu0 %v194
    %213 = vmatprep.subr.bf16.mxu0 0
    %214 = vmatpush1.bf16.msra.mxu0 %v195
    %215 = vmatprep.subr.bf16.mxu0 0
    %216 = vmatpush1.bf16.msra.mxu0 %v196
    %217 = vmatprep.subr.bf16.mxu0 0
    %218 = vmatpush1.bf16.msra.mxu0 %v197
    %219 = vmatprep.subr.bf16.mxu0 0
    %220 = vmatpush1.bf16.msra.mxu0 %v198
    %221 = vmatprep.subr.bf16.mxu0 0
    %222 = vmatpush1.bf16.msra.mxu0 %v199
    %223 = vmatprep.subr.bf16.mxu0 0
    %224 = vmatpush1.bf16.msra.mxu0 %v200
    %225 = vmatprep.subr.bf16.mxu0 0
    %226 = vmatpush1.bf16.msra.mxu0 0
    %227 = vmatprep.subr.bf16.mxu0 0
    %228 = vmatpush1.bf16.msra.mxu0 0
    %229 = vmatprep.subr.bf16.mxu0 0
    %230 = vmatpush1.bf16.msra.mxu0 0
    %231 = vmatprep.subr.bf16.mxu0 0
    %232 = vmatpush1.bf16.msra.mxu0 0
    %233 = vmatprep.subr.bf16.mxu0 0
    %234 = vmatpush1.bf16.msra.mxu0 0
    %235 = vmatprep.subr.bf16.mxu0 0
    %236 = vmatpush1.bf16.msra.mxu0 0
    %237 = vmatprep.subr.bf16.mxu0 0
    %238 = vmatpush1.bf16.msra.mxu0 0
    %239 = vmatprep.subr.bf16.mxu0 0
    %240 = vmatpush1.bf16.msra.mxu0 0
    %241 = vmatprep.mubr.bf16.mxu0 0
    %242 = vmatmul.mubr.bf16.gmra.mrb[0].mxu0 %v137
    %v243 = vpop.f32.mrb[0].mxu0
    %v244 = vadd.f32 0.0, %v243
    %v245 = vpop.f32.mrb[0].mxu0
    %v246 = vpop.f32.mrb[0].mxu0
    %v247 = vadd.f32 0.0, %v246
    %v248 = vpop.f32.mrb[0].mxu0
    %249 = vmatprep.mubr.bf16.mxu0 0
    %250 = vmatmul.mubr.bf16.gmra.mrb[0].mxu0 %v138
    %v251 = vpop.f32.mrb[0].mxu0
    %v252 = vadd.f32 0.0, %v251
    %v253 = vpop.f32.mrb[0].mxu0
    %v254 = vpop.f32.mrb[0].mxu0
    %v255 = vadd.f32 0.0, %v254
    %v256 = vpop.f32.mrb[0].mxu0
    %257 = vmatprep.mubr.bf16.mxu0 0
    %258 = vmatmul.mubr.bf16.gmra.mrb[0].mxu0 %v139
    %v259 = vpop.f32.mrb[0].mxu0
    %v260 = vadd.f32 0.0, %v259
    %v261 = vpop.f32.mrb[0].mxu0
    %v262 = vpop.f32.mrb[0].mxu0
    %v263 = vadd.f32 0.0, %v262
    %v264 = vpop.f32.mrb[0].mxu0
    %265 = vmatprep.mubr.bf16.mxu0 0
    %266 = vmatmul.mubr.bf16.gmra.mrb[0].mxu0 %v140
    %v267 = vpop.f32.mrb[0].mxu0
    %v268 = vadd.f32 0.0, %v267
    %v269 = vpop.f32.mrb[0].mxu0
    %v270 = vpop.f32.mrb[0].mxu0
    %v271 = vadd.f32 0.0, %v270
    %v272 = vpop.f32.mrb[0].mxu0
    %273 = vmatprep.mubr.bf16.mxu0 0
    %274 = vmatmul.mubr.bf16.gmra.mrb[0].mxu0 %v141
    %v275 = vpop.f32.mrb[0].mxu0
    %v276 = vadd.f32 0.0, %v275
    %v277 = vpop.f32.mrb[0].mxu0
    %v278 = vpop.f32.mrb[0].mxu0
    %v279 = vadd.f32 0.0, %v278
    %v280 = vpop.f32.mrb[0].mxu0
    %281 = vmatprep.mubr.bf16.mxu0 0
    %282 = vmatmul.mubr.bf16.gmra.mrb[0].mxu0 %v142
    %v283 = vpop.f32.mrb[0].mxu0
    %v284 = vadd.f32 0.0, %v283
    %v285 = vpop.f32.mrb[0].mxu0
    %v286 = vpop.f32.mrb[0].mxu0
    %v287 = vadd.f32 0.0, %v286
    %v288 = vpop.f32.mrb[0].mxu0
    %289 = vmatprep.mubr.bf16.mxu0 0
    %290 = vmatmul.mubr.bf16.gmra.mrb[0].mxu0 %v143
    %v291 = vpop.f32.mrb[0].mxu0
    %v292 = vadd.f32 0.0, %v291
    %v293 = vpop.f32.mrb[0].mxu0
    %v294 = vpop.f32.mrb[0].mxu0
    %v295 = vadd.f32 0.0, %v294
    %v296 = vpop.f32.mrb[0].mxu0
    %297 = vmatprep.mubr.bf16.mxu0 0
    %298 = vmatmul.mubr.bf16.gmra.mrb[0].mxu0 %v144
    %v299 = vpop.f32.mrb[0].mxu0
    %v300 = vadd.f32 0.0, %v299
    %v301 = vpop.f32.mrb[0].mxu0
    %v302 = vpop.f32.mrb[0].mxu0
    %v303 = vadd.f32 0.0, %v302
    %v304 = vpop.f32.mrb[0].mxu0
    %305 = vdwg.mxu0
    %v306 = vadd.f32 %v145, %v244
    %v307 = vadd.f32 %v146, %v247
    %v308 = vadd.f32 %v147, %v252
    %v309 = vadd.f32 %v148, %v255
    %v310 = vadd.f32 %v149, %v260
    %v311 = vadd.f32 %v150, %v263
    %v312 = vadd.f32 %v151, %v268
    %v313 = vadd.f32 %v152, %v271
    %v314 = vadd.f32 %v153, %v276
    %v315 = vadd.f32 %v154, %v279
    %v316 = vadd.f32 %v155, %v284
    %v317 = vadd.f32 %v156, %v287
    %v318 = vadd.f32 %v157, %v292
    %v319 = vadd.f32 %v158, %v295
    %v320 = vadd.f32 %v159, %v300
    %v321 = vadd.f32 %v160, %v303
    %vm322 = vcmask 261120
    %323 = vst.msk [vmem:[#allocation2] sm:$0xff] %vm322, %v306
    %324 = vst.msk [vmem:[#allocation2 + $0x8] sm:$0xff] %vm322, %v307
    %325 = vst.msk [vmem:[#allocation2 + $0x10] sm:$0xff] %vm322, %v308
    %326 = vst.msk [vmem:[#allocation2 + $0x18] sm:$0xff] %vm322, %v309
    %327 = vst.msk [vmem:[#allocation2 + $0x20] sm:$0xff] %vm322, %v310
    %328 = vst.msk [vmem:[#allocation2 + $0x28] sm:$0xff] %vm322, %v311
    %329 = vst.msk [vmem:[#allocation2 + $0x30] sm:$0xff] %vm322, %v312
    %330 = vst.msk [vmem:[#allocation2 + $0x38] sm:$0xff] %vm322, %v313
    %331 = vst.msk [vmem:[#allocation2 + $0x40] sm:$0xff] %vm322, %v314
    %332 = vst.msk [vmem:[#allocation2 + $0x48] sm:$0xff] %vm322, %v315
    %333 = vst.msk [vmem:[#allocation2 + $0x50] sm:$0xff] %vm322, %v316
    %334 = vst.msk [vmem:[#allocation2 + $0x58] sm:$0xff] %vm322, %v317
    %335 = vst.msk [vmem:[#allocation2 + $0x60] sm:$0xff] %vm322, %v318
    %336 = vst.msk [vmem:[#allocation2 + $0x68] sm:$0xff] %vm322, %v319
    %337 = vst.msk [vmem:[#allocation2 + $0x70] sm:$0xff] %vm322, %v320
    %338 = vst.msk [vmem:[#allocation2 + $0x78] sm:$0xff] %vm322, %v321
  $region25: #{tpu_custom_call.1} parent=0 // pred_fallthru
    _
  // Predicated region
  $region26: #{tpu_custom_call.1} parent=0 // pred_check
    %p339 = pneg %p91
  $region27: #{tpu_custom_call.1} parent=0 // pred_check_branch
    %341 = sbr.rel (%p339) target = $region29
  $region28: #{tpu_custom_call.1} parent=0 // pred_region
    %v342 = vld [vmem:[#allocation2] sm:$0xff]
    %v343 = vld [vmem:[#allocation2 + $0x8] sm:$0xff]
    %v344 = vld [vmem:[#allocation2 + $0x10] sm:$0xff]
    %v345 = vld [vmem:[#allocation2 + $0x18] sm:$0xff]
    %v346 = vld [vmem:[#allocation2 + $0x20] sm:$0xff]
    %v347 = vld [vmem:[#allocation2 + $0x28] sm:$0xff]
    %v348 = vld [vmem:[#allocation2 + $0x30] sm:$0xff]
    %v349 = vld [vmem:[#allocation2 + $0x38] sm:$0xff]
    %v350 = vld [vmem:[#allocation2 + $0x40] sm:$0xff]
    %v351 = vld [vmem:[#allocation2 + $0x48] sm:$0xff]
    %v352 = vld [vmem:[#allocation2 + $0x50] sm:$0xff]
    %v353 = vld [vmem:[#allocation2 + $0x58] sm:$0xff]
    %v354 = vld [vmem:[#allocation2 + $0x60] sm:$0xff]
    %v355 = vld [vmem:[#allocation2 + $0x68] sm:$0xff]
    %v356 = vld [vmem:[#allocation2 + $0x70] sm:$0xff]
    %v357 = vld [vmem:[#allocation2 + $0x78] sm:$0xff]
    %v358 = vld [vmem:[%s5] sm:$0xff]
    %v359 = vld [vmem:[%s5 + $0x8] sm:$0xff]
    %v360 = vld [vmem:[%s5 + $0x10] sm:$0xff]
    %v361 = vld [vmem:[%s5 + $0x18] sm:$0xff]
    %v362 = vld [vmem:[%s5 + $0x20] sm:$0xff]
    %v363 = vld [vmem:[%s5 + $0x28] sm:$0xff]
    %v364 = vld [vmem:[%s5 + $0x30] sm:$0xff]
    %v365 = vld [vmem:[%s5 + $0x38] sm:$0xff]
    %v366 = vld [vmem:[%s5 + $0x40] sm:$0xff]
    %v367 = vld [vmem:[%s5 + $0x48] sm:$0xff]
    %v368 = vld [vmem:[%s5 + $0x50] sm:$0xff]
    %v369 = vld [vmem:[%s5 + $0x58] sm:$0xff]
    %v370 = vld [vmem:[%s5 + $0x60] sm:$0xff]
    %v371 = vld [vmem:[%s5 + $0x68] sm:$0xff]
    %v372 = vld [vmem:[%s5 + $0x70] sm:$0xff]
    %v373 = vld [vmem:[%s5 + $0x78] sm:$0xff]
    %375 = vset.pattern.permute.xlu0 0
    %376 = vperm.xlu0 %375, %v358
    %v377 = vpop.permute.xlu0 %376
    %380 = vset.pattern.permute.xlu0 0
    %381 = vperm.xlu0 %380, %v359
    %v382 = vpop.permute.xlu0 %381
    %385 = vset.pattern.permute.xlu0 0
    %386 = vperm.xlu0 %385, %v360
    %v387 = vpop.permute.xlu0 %386
    %390 = vset.pattern.permute.xlu0 0
    %391 = vperm.xlu0 %390, %v361
    %v392 = vpop.permute.xlu0 %391
    %395 = vset.pattern.permute.xlu0 0
    %396 = vperm.xlu0 %395, %v362
    %v397 = vpop.permute.xlu0 %396
    %400 = vset.pattern.permute.xlu0 0
    %401 = vperm.xlu0 %400, %v363
    %v402 = vpop.permute.xlu0 %401
    %405 = vset.pattern.permute.xlu0 0
    %406 = vperm.xlu0 %405, %v364
    %v407 = vpop.permute.xlu0 %406
    %410 = vset.pattern.permute.xlu0 0
    %411 = vperm.xlu0 %410, %v365
    %v412 = vpop.permute.xlu0 %411
    %415 = vset.pattern.permute.xlu0 0
    %416 = vperm.xlu0 %415, %v366
    %v417 = vpop.permute.xlu0 %416
    %420 = vset.pattern.permute.xlu0 0
    %421 = vperm.xlu0 %420, %v367
    %v422 = vpop.permute.xlu0 %421
    %425 = vset.pattern.permute.xlu0 0
    %426 = vperm.xlu0 %425, %v368
    %v427 = vpop.permute.xlu0 %426
    %430 = vset.pattern.permute.xlu0 0
    %431 = vperm.xlu0 %430, %v369
    %v432 = vpop.permute.xlu0 %431
    %435 = vset.pattern.permute.xlu0 0
    %436 = vperm.xlu0 %435, %v370
    %v437 = vpop.permute.xlu0 %436
    %440 = vset.pattern.permute.xlu0 0
    %441 = vperm.xlu0 %440, %v371
    %v442 = vpop.permute.xlu0 %441
    %445 = vset.pattern.permute.xlu0 0
    %446 = vperm.xlu0 %445, %v372
    %v447 = vpop.permute.xlu0 %446
    %450 = vset.pattern.permute.xlu0 0
    %451 = vperm.xlu0 %450, %v373
    %v452 = vpop.permute.xlu0 %451
    %v454 = vmul.f32 %v342, %v377
    %v455 = vmul.f32 %v343, %v382
    %v456 = vmul.f32 %v344, %v387
    %v457 = vmul.f32 %v345, %v392
    %v458 = vmul.f32 %v346, %v397
    %v459 = vmul.f32 %v347, %v402
    %v460 = vmul.f32 %v348, %v407
    %v461 = vmul.f32 %v349, %v412
    %v462 = vmul.f32 %v350, %v417
    %v463 = vmul.f32 %v351, %v422
    %v464 = vmul.f32 %v352, %v427
    %v465 = vmul.f32 %v353, %v432
    %v466 = vmul.f32 %v354, %v437
    %v467 = vmul.f32 %v355, %v442
    %v468 = vmul.f32 %v356, %v447
    %v469 = vmul.f32 %v357, %v452
    %v470 = vld [vmem:[%s4] sm:$0x1]
    %v472 = vlaneseq
    %v473 = vshrl.u32 %v472, 7
    %v474 = vsub.s32 0, %v473
    %v475 = vrot.slane %v470, %v474
    %v477 = vadd.f32 %v454, %v475
    %v478 = vadd.f32 %v455, %v475
    %v479 = vadd.f32 %v456, %v475
    %v480 = vadd.f32 %v457, %v475
    %v481 = vadd.f32 %v458, %v475
    %v482 = vadd.f32 %v459, %v475
    %v483 = vadd.f32 %v460, %v475
    %v484 = vadd.f32 %v461, %v475
    %v485 = vadd.f32 %v462, %v475
    %v486 = vadd.f32 %v463, %v475
    %v487 = vadd.f32 %v464, %v475
    %v488 = vadd.f32 %v465, %v475
    %v489 = vadd.f32 %v466, %v475
    %v490 = vadd.f32 %v467, %v475
    %v491 = vadd.f32 %v468, %v475
    %v492 = vadd.f32 %v469, %v475
    %v493 = vmax.f32 %v477, 0.0
    %v494 = vmax.f32 %v478, 0.0
    %v495 = vmax.f32 %v479, 0.0
    %v496 = vmax.f32 %v480, 0.0
    %v497 = vmax.f32 %v481, 0.0
    %v498 = vmax.f32 %v482, 0.0
    %v499 = vmax.f32 %v483, 0.0
    %v500 = vmax.f32 %v484, 0.0
    %v501 = vmax.f32 %v485, 0.0
    %v502 = vmax.f32 %v486, 0.0
    %v503 = vmax.f32 %v487, 0.0
    %v504 = vmax.f32 %v488, 0.0
    %v505 = vmax.f32 %v489, 0.0
    %v506 = vmax.f32 %v490, 0.0
    %v507 = vmax.f32 %v491, 0.0
    %v508 = vmax.f32 %v492, 0.0
    %v509 = vpack.c.bf16 %v494, %v493
    %v510 = vpack.c.bf16 %v496, %v495
    %v511 = vpack.c.bf16 %v498, %v497
    %v512 = vpack.c.bf16 %v500, %v499
    %v513 = vpack.c.bf16 %v502, %v501
    %v514 = vpack.c.bf16 %v504, %v503
    %v515 = vpack.c.bf16 %v506, %v505
    %v516 = vpack.c.bf16 %v508, %v507
    %v525 = vunpack.c.l.b16 %v509
    %v526 = vunpack.c.h.b16 %v509
    %v527 = vunpack.c.l.b16 %v510
    %v528 = vunpack.c.h.b16 %v510
    %v529 = vunpack.c.l.b16 %v511
    %v530 = vunpack.c.h.b16 %v511
    %v531 = vunpack.c.l.b16 %v512
    %v532 = vunpack.c.h.b16 %v512
    %v533 = vunpack.c.l.b16 %v513
    %v534 = vunpack.c.h.b16 %v513
    %v535 = vunpack.c.l.b16 %v514
    %v536 = vunpack.c.h.b16 %v514
    %v537 = vunpack.c.l.b16 %v515
    %v538 = vunpack.c.h.b16 %v515
    %v539 = vunpack.c.l.b16 %v516
    %v540 = vunpack.c.h.b16 %v516
    %v541 = vpack.c.b16 %v525, %v525
    %v542 = vpack.c.b16 %v526, %v526
    %v543 = vpack.c.b16 %v527, %v527
    %v544 = vpack.c.b16 %v528, %v528
    %v545 = vpack.c.b16 %v529, %v529
    %v546 = vpack.c.b16 %v530, %v530
    %v547 = vpack.c.b16 %v531, %v531
    %v548 = vpack.c.b16 %v532, %v532
    %v549 = vpack.c.b16 %v533, %v533
    %v550 = vpack.c.b16 %v534, %v534
    %v551 = vpack.c.b16 %v535, %v535
    %v552 = vpack.c.b16 %v536, %v536
    %v553 = vpack.c.b16 %v537, %v537
    %v554 = vpack.c.b16 %v538, %v538
    %v555 = vpack.c.b16 %v539, %v539
    %v556 = vpack.c.b16 %v540, %v540
    %vm573 = vcmask 257024
    %574 = vst.msk [vmem:[%s6] sm:$0xf] %vm573, %v541
    %575 = vst.msk [vmem:[%s6 + $0x4] sm:$0xf] %vm573, %v542
    %576 = vst.msk [vmem:[%s6 + $0x8] sm:$0xf] %vm573, %v543
    %577 = vst.msk [vmem:[%s6 + $0xc] sm:$0xf] %vm573, %v544
    %578 = vst.msk [vmem:[%s6 + $0x10] sm:$0xf] %vm573, %v545
    %579 = vst.msk [vmem:[%s6 + $0x14] sm:$0xf] %vm573, %v546
    %580 = vst.msk [vmem:[%s6 + $0x18] sm:$0xf] %vm573, %v547
    %581 = vst.msk [vmem:[%s6 + $0x1c] sm:$0xf] %vm573, %v548
    %582 = vst.msk [vmem:[%s6 + $0x20] sm:$0xf] %vm573, %v549
    %583 = vst.msk [vmem:[%s6 + $0x24] sm:$0xf] %vm573, %v550
    %584 = vst.msk [vmem:[%s6 + $0x28] sm:$0xf] %vm573, %v551
    %585 = vst.msk [vmem:[%s6 + $0x2c] sm:$0xf] %vm573, %v552
    %586 = vst.msk [vmem:[%s6 + $0x30] sm:$0xf] %vm573, %v553
    %587 = vst.msk [vmem:[%s6 + $0x34] sm:$0xf] %vm573, %v554
    %588 = vst.msk [vmem:[%s6 + $0x38] sm:$0xf] %vm573, %v555
    %589 = vst.msk [vmem:[%s6 + $0x3c] sm:$0xf] %vm573, %v556
  $region29: #{tpu_custom_call.1} parent=0 // pred_fallthru
    _
  // Predicated region
  $region30: #{tpu_custom_call.1} parent=0 // pred_check
    _
  $region31: #{tpu_custom_call.1} parent=0 // pred_check_branch
    %591 = sbr.rel (0) target = $region33
  $region32: #{tpu_custom_call.1} parent=0 // pred_region
    _
  $region33: #{tpu_custom_call.1} parent=0 // pred_fallthru
    _
  // Predicated region
  $region34: #{tpu_custom_call.1} parent=0 // pred_check
    _
  $region35: #{tpu_custom_call.1} parent=0 // pred_check_branch
    %593 = sbr.rel (0) target = $region37
  $region36: #{tpu_custom_call.1} parent=0 // pred_region
    _
  $region37: #{tpu_custom_call.1} parent=0 // pred_fallthru
    _

</llo_original>
